<compile_context>
chip_gen: v6e
topology: v6e:2x2x1
jax: 0.10.0
libtpu: 0.0.40
codegen_flags: <defaults>
</compile_context>

<pallas_src>
import functools

import jax
import jax.numpy as jnp
from jax.experimental import pallas as pl
from jax.experimental.pallas import tpu as pltpu


# ----------------------------------------------------------------------------
# Helpers
# ----------------------------------------------------------------------------
def _choose_tm(m):
    """Row-tile size: multiple of 16 that divides M, else whole M (full dim)."""
    for tm in (512, 256, 128, 64, 32, 16):
        if m % tm == 0:
            return tm
    return m


def _round_up(x, m):
    return ((x + m - 1) // m) * m


# ----------------------------------------------------------------------------
# Pallas kernels
# ----------------------------------------------------------------------------
def _matmul_act_kernel(x_ref, w_ref, b_ref, o_ref, *, act):
    # x: (TM, Kc) bf16, w: (Kc, Npad) bf16 (resident), b: (1, Npad) f32 (resident)
    y = jnp.dot(x_ref[...], w_ref[...], preferred_element_type=jnp.float32)
    y = y + b_ref[...]
    if act == "leaky_relu":
        y = jnp.where(y > 0, y, 0.2 * y)
    elif act == "relu":
        y = jnp.maximum(y, 0.0)
    o_ref[...] = y


def matmul_act(x, w, b, act):
    """Fused (x @ w + b) -> activation.  x:(M,K) w:(K,N) b:(N,) -> (M,N) f32.

    M is tiled over a parallel grid; N is padded to a multiple of 128 so the
    output stores are lane-dense (padding sliced off afterwards).
    """
    M, Kc = x.shape
    N = w.shape[1]
    N_pad = _round_up(N, 128)
    if N_pad != N:
        w = jnp.pad(w, ((0, 0), (0, N_pad - N)))
        b = jnp.pad(b, (0, N_pad - N))
    tm = _choose_tm(M)

    out = pl.pallas_call(
        functools.partial(_matmul_act_kernel, act=act),
        out_shape=jax.ShapeDtypeStruct((M, N_pad), jnp.float32),
        grid=(M // tm,),
        in_specs=[
            pl.BlockSpec((tm, Kc), lambda i: (i, 0)),       # patches: tiled in M
            pl.BlockSpec((Kc, N_pad), lambda i: (0, 0)),    # weight: resident
            pl.BlockSpec((1, N_pad), lambda i: (0, 0)),     # bias:   resident
        ],
        out_specs=pl.BlockSpec((tm, N_pad), lambda i: (i, 0)),
        compiler_params=pltpu.CompilerParams(
            dimension_semantics=("parallel",)),
    )(x.astype(jnp.bfloat16),
      w.astype(jnp.bfloat16),
      b.reshape(1, N_pad).astype(jnp.float32))

    return out[:, :N] if N_pad != N else out


def _attn_gate_kernel(x_ref, s_ref, w_ref, b_ref, wpsi_ref, bpsi_ref, o_ref):
    x = x_ref[...]
    s = s_ref[...]
    # single MXU pass: [x | s] @ [Wg ; Wx]
    xs = jnp.concatenate([x, s], axis=-1).astype(jnp.bfloat16)
    f = jnp.dot(xs, w_ref[...], preferred_element_type=jnp.float32) + b_ref[...]
    f = jnp.maximum(f, 0.0)
    psi_lin = jnp.sum(f * wpsi_ref[...], axis=-1, keepdims=True) + bpsi_ref[0, 0]
    psi = jax.nn.sigmoid(psi_lin)
    o_ref[...] = x + s * psi          # x + attention(x, skip)


def attention_add(x_mc, s_mc, w_cat, b, wpsi, bpsi):
    """x,s: (M,C) channels-last rows.  Returns x + skip*psi, shape (M,C) f32."""
    M, C = x_mc.shape
    Ci = w_cat.shape[1]
    tm = _choose_tm(M)
    return pl.pallas_call(
        _attn_gate_kernel,
        out_shape=jax.ShapeDtypeStruct((M, C), jnp.float32),
        grid=(M // tm,),
        in_specs=[
            pl.BlockSpec((tm, C), lambda i: (i, 0)),        # x tile
            pl.BlockSpec((tm, C), lambda i: (i, 0)),        # skip tile
            pl.BlockSpec((2 * C, Ci), lambda i: (0, 0)),    # [Wg;Wx] resident
            pl.BlockSpec((1, Ci), lambda i: (0, 0)),        # bias   resident
            pl.BlockSpec((1, Ci), lambda i: (0, 0)),        # Wpsi   resident
            pl.BlockSpec(memory_space=pltpu.MemorySpace.SMEM),  # bpsi scalar
        ],
        out_specs=pl.BlockSpec((tm, C), lambda i: (i, 0)),
        compiler_params=pltpu.CompilerParams(
            dimension_semantics=("parallel",)),
    )(x_mc.astype(jnp.float32), s_mc.astype(jnp.float32),
      w_cat.astype(jnp.bfloat16),
      b.reshape(1, Ci).astype(jnp.float32),
      wpsi.reshape(1, Ci).astype(jnp.float32),
      bpsi.reshape(1, 1).astype(jnp.float32))


# ----------------------------------------------------------------------------
# Conv / deconv wrappers (channels-last (B, L, C) layout, light XLA glue)
# ----------------------------------------------------------------------------
def conv1d_same_stride2(x_blc, w, b, act):
    """x:(B,L,Cin), w:(Cout,Cin,K) (PyTorch layout), stride=2, TF-SAME padding."""
    B, L, Cin = x_blc.shape
    Cout, _, K = w.shape
    s = 2
    L_out = -(-L // s)
    pad_total = max((L_out - 1) * s + K - L, 0)
    pl_, pr_ = pad_total // 2, pad_total - pad_total // 2
    xp = jnp.pad(x_blc, ((0, 0), (pl_, pr_), (0, 0)))
    idx = jnp.arange(L_out)[:, None] * s + jnp.arange(K)[None, :]
    patches = xp[:, idx, :].reshape(B * L_out, K * Cin)       # (M, K*Cin)
    w_mat = jnp.transpose(w, (2, 1, 0)).reshape(K * Cin, Cout)
    y = matmul_act(patches, w_mat, b, act)                    # Pallas
    return y.reshape(B, L_out, Cout)


def deconv1d_stride2(x_blc, w, b, act):
    """ConvTranspose1d, stride=2, L_out = 2*L_in, polyphase (no zero-stuffing).

    y[2t+r] = sum_{k ≡ (r+p) mod 2} x[t + (r+p-k)//2] @ w[:, :, k],  p=(K-2)//2.
    Both output parities are produced by a single GEMM whose output columns are
    [parity0 channels | parity1 channels]; interleaving is a free reshape.
    """
    B, L, Cin = x_blc.shape
    _, Cout, K = w.shape
    if K % 2 != 0:
        # TODO(synk): odd transposed-conv kernels need different padding math.
        raise NotImplementedError("deconv1d_stride2 requires even kernel size")
    p = (K - 2) // 2

    taps = []                                                 # (r, k, shift d)
    for r in (0, 1):
        for k in range(K):
            if (k - (r + p)) % 2 == 0:
                taps.append((r, k, (r + p - k) // 2))
    d_min = min(d for _, _, d in taps)
    d_max = max(d for _, _, d in taps)
    Wwin = d_max - d_min + 1
    left_pad = max(0, -d_min)
    right_pad = max(0, d_max)

    xp = jnp.pad(x_blc, ((0, 0), (left_pad, right_pad), (0, 0)))
    idx = (jnp.arange(L)[:, None] + (d_min + left_pad)) + jnp.arange(Wwin)[None, :]
    patches = xp[:, idx, :].reshape(B * L, Wwin * Cin)        # (M, Wwin*Cin)

    # block weight: (Wwin, Cin, 2, Cout) with w[:, :, k] at (d-d_min, :, r, :)
    w_blk = jnp.zeros((Wwin, Cin, 2, Cout), jnp.float32)
    for r, k, d in taps:
        w_blk = w_blk.at[d - d_min, :, r, :].set(w[:, :, k])
    w_mat = w_blk.reshape(Wwin * Cin, 2 * Cout)
    b2 = jnp.concatenate([b, b])

    y = matmul_act(patches, w_mat, b2, act)                   # (B*L, 2*Cout)
    return y.reshape(B, 2 * L, Cout)


# ----------------------------------------------------------------------------
# Parameters + forward
# ----------------------------------------------------------------------------
def init_generator_params(key, input_channels, output_channels,
                          filter_sizes, kernel_sizes):
    n = len(filter_sizes)
    keys = jax.random.split(key, 4 * n + 4 * max(n - 1, 1) + 4)
    ki = iter(range(len(keys)))
    params = {"down": [], "up": [], "attn": []}
    # downsample convs
    cin = input_channels
    for i in range(n):
        cout, k = filter_sizes[i], kernel_sizes[i]
        params["down"].append({
            "w": 0.1 * jax.random.normal(keys[next(ki)], (cout, cin, k), jnp.float32),
            "b": 0.1 * jax.random.normal(keys[next(ki)], (cout,), jnp.float32),
        })
        cin = cout
    # upsample deconvs (reverse order, as in the torch module)
    for i in range(n - 1, -1, -1):
        cin_u = filter_sizes[i]
        cout_u = filter_sizes[i - 1] if i > 0 else output_channels
        k = kernel_sizes[i]
        params["up"].append({
            "w": 0.1 * jax.random.normal(keys[next(ki)], (cin_u, cout_u, k), jnp.float32),
            "b": 0.1 * jax.random.normal(keys[next(ki)], (cout_u,), jnp.float32),
        })
    # attention gates (one used per upsample step i < n-1); Wg/Wx stored stacked
    for i in range(n - 1):
        c = filter_sizes[n - 2 - i]           # channels of x / skip at that step
        ci = filter_sizes[i]                  # AttentionBlock1D(filter_sizes[i])
        wg = 0.1 * jax.random.normal(keys[next(ki)], (c, ci), jnp.float32)
        wx = 0.1 * jax.random.normal(keys[next(ki)], (c, ci), jnp.float32)
        params["attn"].append({
            "w": jnp.concatenate([wg, wx], axis=0),           # (2C, Ci)
            "b": jnp.zeros((ci,), jnp.float32),
            "wpsi": 0.1 * jax.random.normal(keys[next(ki)], (ci,), jnp.float32),
            "bpsi": jnp.zeros((1,), jnp.float32),
        })
    return params


def generator_forward(x_ncl, params):
    n = len(params["down"])
    h = jnp.transpose(x_ncl, (0, 2, 1))                       # NCL -> NLC (once)
    connections = []
    for p in params["down"]:
        h = conv1d_same_stride2(h, p["w"], p["b"], "leaky_relu")
        connections.append(h)
    for i, p in enumerate(params["up"]):
        h = deconv1d_stride2(h, p["w"], p["b"], "relu")
        if i < n - 1:
            skip = connections[n - 2 - i]
            B, L, C = h.shape
            ap = params["attn"][i]
            out = attention_add(h.reshape(B * L, C), skip.reshape(B * L, C),
                                ap["w"], ap["b"], ap["wpsi"], ap["bpsi"])
            h = out.reshape(B, L, C)
    return jnp.transpose(h, (0, 2, 1))                        # NLC -> NCL (once)


if __name__ == "__main__":
    key = jax.random.PRNGKey(0)
    k_in, k_par = jax.random.split(key)

    # small config: input (B=2, Cin=4, L=16)
    input_channels, output_channels = 4, 4
    filter_sizes = [16, 32]
    kernel_sizes = [4, 4]

    x = jax.random.normal(k_in, (2, input_channels, 16), jnp.float32)
    params = init_generator_params(k_par, input_channels, output_channels,
                                   filter_sizes, kernel_sizes)

    y = generator_forward(x, params)
    y = jax.block_until_ready(y)
    assert y.shape == (2, output_channels, 16), y.shape
    print("KERNEL_OK")
</pallas_src>

<mosaic_0001>
module attributes {stable_mosaic.version = 11 : i64} {
  func.func @_matmul_act_kernel(%arg0: i32, %arg1: memref<16x16xbf16, #tpu.memory_space<vmem>>, %arg2: memref<16x128xbf16, #tpu.memory_space<vmem>>, %arg3: memref<1x128xf32, #tpu.memory_space<vmem>>, %arg4: memref<16x128xf32, #tpu.memory_space<vmem>>) attributes {dimension_semantics = [#tpu.dimension_semantics<parallel>], iteration_bounds = array<i64: 1>, scalar_prefetch = 0 : i64, scratch_operands = 0 : i64, tpu.core_type = #tpu.core_type<tc>, window_params = [{transform_indices = @transform_0, window_bounds = array<i64: 16, 16>}, {pipeline_mode = #tpu.pipeline_mode<synchronous>, transform_indices = @transform_1, window_bounds = array<i64: 16, 128>}, {pipeline_mode = #tpu.pipeline_mode<synchronous>, transform_indices = @transform_2, window_bounds = array<i64: 1, 128>}, {transform_indices = @transform_3, window_bounds = array<i64: 16, 128>}]} {
    %c0 = arith.constant 0 : index
    %c0_0 = arith.constant 0 : index
    %0 = vector.load %arg1[%c0, %c0_0] : memref<16x16xbf16, #tpu.memory_space<vmem>>, vector<16x16xbf16>
    %c0_1 = arith.constant 0 : index
    %c0_2 = arith.constant 0 : index
    %1 = vector.load %arg2[%c0_1, %c0_2] : memref<16x128xbf16, #tpu.memory_space<vmem>>, vector<16x128xbf16>
    %cst = arith.constant dense<0.000000e+00> : vector<16x128xf32>
    %2 = tpu.matmul %0, %1, %cst {dimension_numbers = #tpu.dot_dimension_numbers<[1], [0], [0], [1], [0, 0, 1, 1], [], []>} : vector<16x16xbf16>, vector<16x128xbf16>, vector<16x128xf32> -> vector<16x128xf32>
    %c0_3 = arith.constant 0 : index
    %c0_4 = arith.constant 0 : index
    %3 = vector.load %arg3[%c0_3, %c0_4] : memref<1x128xf32, #tpu.memory_space<vmem>>, vector<1x128xf32>
    %4 = vector.broadcast %3 : vector<1x128xf32> to vector<16x128xf32>
    %5 = arith.addf %2, %4 : vector<16x128xf32>
    %cst_5 = arith.constant 0.000000e+00 : f32
    %6 = vector.broadcast %cst_5 : f32 to vector<16x128xf32>
    %7 = arith.cmpf ogt, %5, %6 : vector<16x128xf32>
    %cst_6 = arith.constant 2.000000e-01 : f32
    %8 = vector.broadcast %cst_6 : f32 to vector<16x128xf32>
    %9 = arith.mulf %8, %5 : vector<16x128xf32>
    %10 = arith.select %7, %5, %9 : vector<16x128xi1>, vector<16x128xf32>
    %c0_7 = arith.constant 0 : index
    %c0_8 = arith.constant 0 : index
    %11 = vector.load %arg4[%c0_7, %c0_8] : memref<16x128xf32, #tpu.memory_space<vmem>>, vector<16x128xf32>
    tpu.vector_store %arg4[%c0_7, %c0_8], %10 {strides = array<i32>} : memref<16x128xf32, #tpu.memory_space<vmem>>, vector<16x128xf32>,
    return
  }
  func.func @transform_0(%arg0: i32) -> (i32, i32) {
    %c0_i32 = arith.constant 0 : i32
    %c0_i32_0 = arith.constant 0 : i32
    return %arg0, %c0_i32 : i32, i32
  }
  func.func @transform_1(%arg0: i32) -> (i32, i32) {
    %c0_i32 = arith.constant 0 : i32
    %c0_i32_0 = arith.constant 0 : i32
    %c0_i32_1 = arith.constant 0 : i32
    return %c0_i32, %c0_i32_0 : i32, i32
  }
  func.func @transform_2(%arg0: i32) -> (i32, i32) {
    %c0_i32 = arith.constant 0 : i32
    %c0_i32_0 = arith.constant 0 : i32
    %c0_i32_1 = arith.constant 0 : i32
    return %c0_i32, %c0_i32_0 : i32, i32
  }
  func.func @transform_3(%arg0: i32) -> (i32, i32) {
    %c0_i32 = arith.constant 0 : i32
    %c0_i32_0 = arith.constant 0 : i32
    return %arg0, %c0_i32 : i32, i32
  }
}

</mosaic_0001>

<llo_original>
// kernel: tpu_custom_call.1
$region0: #{tpu_custom_call.1}
  #allocation0 [shape = 'u32[]', space=smem, size = 0x4, offset = 0x4, fixed_abs, tag = 'smem constant byte address 0x4 - core index']
  #allocation1 [shape = 'u32[144,128]{1,0:T(1,128)}', space=vmem, size = 0x12000, scoped, tag = 'internal scratch']
  %s0 = inlined_call_operand.hbm [shape: bf16[16,16], index: 0, kind: input, shape index: {}]
  %s1 = inlined_call_operand.hbm [shape: bf16[16,128], index: 1, kind: input, shape index: {}]
  %s2 = inlined_call_operand.vmem [shape: f32[1,128], index: 2, kind: input, shape index: {}]
  %s3 = inlined_call_operand.hbm [shape: f32[16,128], index: 3, kind: output, shape index: {}]
  %s4 = sld [smem:[#allocation0]]
  $region30: #{tpu_custom_call.1} parent=0
    _
  %s6 = ssub.s32 1, %s4
  %s7 = scalar_select 0, %s6, %s4
  $region1: #{tpu_custom_call.1} parent=0
    #allocation2 [shape = 'u8[4096]{0}', space=vmem, size = 0x1000, scoped, tag = 'input window, operand 0, single buffered']
    #allocation3 [shape = 's32[1]{0}', space=sflag, size = 0x4, scoped, tag = 'scoped memory for tpu_custom_call.1']
    #allocation4 [shape = 's32[1]{0}', space=sflag, size = 0x4, scoped, tag = 'scoped memory for tpu_custom_call.1']
    #allocation5 [shape = 'u8[4096]{0}', space=vmem, size = 0x1000, scoped, tag = 'input window, operand 1, single buffered']
    #allocation6 [shape = 's32[1]{0}', space=sflag, size = 0x4, scoped, tag = 'scoped memory for tpu_custom_call.1']
    #allocation7 [shape = 'u8[8192]{0}', space=vmem, size = 0x2000, scoped, tag = 'output window, operand 0, single buffered']
    %8 = vsyncpa [#allocation3], 0
    %9 = vsyncpa [#allocation6], 0
    %10 = vsyncpa [#allocation4], 0
    // Predicated region
    $region2: #{tpu_custom_call.1} parent=1 // pred_check
      _
    $region3: #{tpu_custom_call.1} parent=1 // pred_check_branch
      %12 = sbr.rel (0) target = $region5
    $region4: #{tpu_custom_call.1} parent=1 // pred_region
      %s14 = ssub.s32 128, 128
      %15 = vsyncadd [#allocation3], %s14
      %s16 = sshll.u32 [#allocation2], 4
      %s17 = int_to_ptr.vmem [resolvable:$true] %s16
      %22 = dma.hbm_to_vmem [thread:$0]  %s0, 128, %s17, [#allocation3], 64, 64, 4
    $region5: #{tpu_custom_call.1} parent=1 // pred_fallthru
      _
    // Predicated region
    $region6: #{tpu_custom_call.1} parent=1 // pred_check
      _
    $region7: #{tpu_custom_call.1} parent=1 // pred_check_branch
      %24 = sbr.rel (0) target = $region9
    $region8: #{tpu_custom_call.1} parent=1 // pred_region
      %s26 = ssub.s32 128, 128
      %27 = vsyncadd [#allocation6], %s26
      %s28 = sshll.u32 [#allocation5], 4
      %s29 = int_to_ptr.vmem [resolvable:$true] %s28
      %34 = dma.hbm_to_vmem [thread:$0]  %s1, 128, %s29, [#allocation6], 64, 64, 4
    $region9: #{tpu_custom_call.1} parent=1 // pred_fallthru
      _
    // Predicated region
    $region10: #{tpu_custom_call.1} parent=1 // pred_check
      _
    $region11: #{tpu_custom_call.1} parent=1 // pred_check_branch
      %36 = sbr.rel (0) target = $region13
    $region12: #{tpu_custom_call.1} parent=1 // pred_region
      _
    $region13: #{tpu_custom_call.1} parent=1 // pred_fallthru
      _
    // Predicated region
    $region14: #{tpu_custom_call.1} parent=1 // pred_check
      _
    $region15: #{tpu_custom_call.1} parent=1 // pred_check_branch
      %38 = sbr.rel (0) target = $region17
    $region16: #{tpu_custom_call.1} parent=1 // pred_region
      %39 = dma.done [#allocation3], 128
    $region17: #{tpu_custom_call.1} parent=1 // pred_fallthru
      _
    // Predicated region
    $region18: #{tpu_custom_call.1} parent=1 // pred_check
      _
    $region19: #{tpu_custom_call.1} parent=1 // pred_check_branch
      %41 = sbr.rel (0) target = $region21
    $region20: #{tpu_custom_call.1} parent=1 // pred_region
      %42 = dma.done [#allocation6], 128
    $region21: #{tpu_custom_call.1} parent=1 // pred_fallthru
      _
    %v44 = vld [vmem:[#allocation2] sm:$0xf]
    %v45 = vld [vmem:[#allocation2 + $0x4] sm:$0xf]
    %v46 = vld [vmem:[#allocation5] sm:$0xf]
    %v47 = vld [vmem:[#allocation5 + $0x4] sm:$0xf]
    %v48 = vld [vmem:[%s2] sm:$0x1]
    %v50 = vlaneseq
    %v51 = vshrl.u32 %v50, 7
    %v52 = vsub.s32 0, %v51
    %v53 = vrot.slane %v48, %v52
    %v57 = vunpack.c.l.b16 %v44
    %v58 = vunpack.c.l.b16 %v45
    %v59 = vpack.c.b16 %v58, %v57
    %v62 = vunpack.c.l.b16 %v46
    %v63 = vunpack.c.l.b16 %v47
    %v64 = vpack.c.b16 %v63, %v62
    %vm66 = vcmask 130048
    %v68 = vsel %vm66, %v59, 0
    %70 = vmatprep.subr.bf16.mxu0 0
    %71 = vmatpush1.bf16.msra.mxu0 0
    %72 = vmatprep.subr.bf16.mxu0 0
    %73 = vmatpush1.bf16.msra.mxu0 0
    %74 = vmatprep.subr.bf16.mxu0 0
    %75 = vmatpush1.bf16.msra.mxu0 0
    %76 = vmatprep.subr.bf16.mxu0 0
    %77 = vmatpush1.bf16.msra.mxu0 0
    %78 = vmatprep.subr.bf16.mxu0 0
    %79 = vmatpush1.bf16.msra.mxu0 0
    %80 = vmatprep.subr.bf16.mxu0 0
    %81 = vmatpush1.bf16.msra.mxu0 0
    %82 = vmatprep.subr.bf16.mxu0 0
    %83 = vmatpush1.bf16.msra.mxu0 0
    %84 = vmatprep.subr.bf16.mxu0 0
    %85 = vmatpush1.bf16.msra.mxu0 %v64
    %86 = vmatprep.subr.bf16.mxu0 0
    %87 = vmatpush2.bf16.msra.mxu0 0
    %88 = vmatprep.subr.bf16.mxu0 0
    %89 = vmatpush2.bf16.msra.mxu0 0
    %90 = vmatprep.subr.bf16.mxu0 0
    %91 = vmatpush2.bf16.msra.mxu0 0
    %92 = vmatprep.subr.bf16.mxu0 0
    %93 = vmatpush2.bf16.msra.mxu0 0
    %94 = vmatprep.subr.bf16.mxu0 0
    %95 = vmatpush2.bf16.msra.mxu0 0
    %96 = vmatprep.subr.bf16.mxu0 0
    %97 = vmatpush2.bf16.msra.mxu0 0
    %98 = vmatprep.subr.bf16.mxu0 0
    %99 = vmatpush2.bf16.msra.mxu0 0
    %100 = vmatprep.subr.bf16.mxu0 0
    %101 = vmatpush2.bf16.msra.mxu0 0
    %102 = vmatprep.mubr.bf16.mxu0 0
    %103 = vmatmul.mubr.bf16.gmra.mxu0 %v68
    %v104 = vpop.f32.mrf.mxu0
    %v105 = vadd.f32 %v53, %v104
    %v106 = vpop.f32.mrf.mxu0
    %v107 = vpop.f32.mrf.mxu0
    %v108 = vadd.f32 %v53, %v107
    %v109 = vpop.f32.mrf.mxu0
    %110 = vdwg.mxu0
    %vm111 = vcmp.gt.f32.partialorder %v105, 0.0
    %vm112 = vcmp.gt.f32.partialorder %v108, 0.0
    %v113 = vmul.f32 %v105, 0.2
    %v114 = vmul.f32 %v108, 0.2
    %v115 = vsel %vm111, %v105, %v113
    %v116 = vsel %vm112, %v108, %v114
    %117 = vst [vmem:[#allocation7] sm:$0xff] %v115
    %118 = vst [vmem:[#allocation7 + $0x8] sm:$0xff] %v116
    // Predicated region
    $region22: #{tpu_custom_call.1} parent=1 // pred_check
      _
    $region23: #{tpu_custom_call.1} parent=1 // pred_check_branch
      %120 = sbr.rel (0) target = $region25
    $region24: #{tpu_custom_call.1} parent=1 // pred_region
      %s122 = ssub.s32 256, 256
      %123 = vsyncadd [#allocation4], %s122
      %s124 = sshll.u32 [#allocation7], 4
      %s125 = int_to_ptr.vmem [resolvable:$true] %s124
      %130 = dma.vmem_to_hbm [thread:$0]  %s125, 256, %s3, [#allocation4], 128, 128, 8
    $region25: #{tpu_custom_call.1} parent=1 // pred_fallthru
      _
    // Predicated region
    $region26: #{tpu_custom_call.1} parent=1 // pred_check
      _
    $region27: #{tpu_custom_call.1} parent=1 // pred_check_branch
      %132 = sbr.rel (0) target = $region29
    $region28: #{tpu_custom_call.1} parent=1 // pred_region
      %133 = dma.done [#allocation4], 256
    $region29: #{tpu_custom_call.1} parent=1 // pred_fallthru
      _
    %134 = vsyncpa [#allocation3], 1
    %135 = vsyncpa [#allocation6], 1
    %136 = vsyncpa [#allocation4], 1

</llo_original>
